<compile_context>
chip_gen: v6e
topology: v6e:2x2x1
jax: 0.10.0
libtpu: 0.0.40
codegen_flags: <defaults>
</compile_context>

<pallas_src>
import functools
import math

import jax
import jax.numpy as jnp
from jax.experimental import pallas as pl
from jax.experimental.pallas import tpu as pltpu


# ----------------------------------------------------------------------------
# Buffer construction (plain JAX glue, mirrors torch __init__)
# ----------------------------------------------------------------------------
def make_positional_encoding_table(d_model: int, max_len: int = 5000) -> jnp.ndarray:
    """Same sinusoidal table as the torch module, trimmed to exactly d_model
    columns at build time (so the forward never needs a column slice)."""
    d_pad = (d_model + 1) // 2 * 2
    position = jnp.arange(0, max_len, dtype=jnp.float32)[:, None]            # [L, 1]
    div_term = jnp.exp(
        jnp.arange(0, d_model, 2, dtype=jnp.float32) * (-math.log(10000.0) / d_model)
    )                                                                         # [d_pad//2]
    angles = position * div_term                                              # [L, d_pad//2]
    pe = jnp.zeros((max_len, d_pad), dtype=jnp.float32)
    pe = pe.at[:, 0::2].set(jnp.sin(angles))
    pe = pe.at[:, 1::2].set(jnp.cos(angles))
    return pe[:, :d_model]


# ----------------------------------------------------------------------------
# Kernels (operate on lane-dense [seq_tile, B*D] slabs)
# ----------------------------------------------------------------------------
def _pe_add_kernel(x_ref, pe_ref, o_ref, *, batch):
    # x_ref: [ts, B*D], pe_ref: [ts, D] -> repeat pe B times along the lane axis
    pe_tiled = jnp.tile(pe_ref[...], (1, batch))            # [ts, B*D]
    o_ref[...] = (x_ref[...] + pe_tiled).astype(o_ref.dtype)


def _pe_add_dropout_kernel(x_ref, bits_ref, pe_ref, o_ref, *, batch, p):
    pe_tiled = jnp.tile(pe_ref[...], (1, batch))             # [ts, B*D]
    y = x_ref[...].astype(jnp.float32) + pe_tiled
    # keep with probability ~ (1 - p);   scale kept values by 1 / (1 - p)
    thr = jnp.uint32(min(int(round(p * 2.0 ** 32)), 2 ** 32 - 1))
    keep = bits_ref[...] >= thr
    scale = jnp.float32(1.0 / (1.0 - p))
    o_ref[...] = jnp.where(keep, y * scale, jnp.zeros_like(y)).astype(o_ref.dtype)


# ----------------------------------------------------------------------------
# Wrapper
# ----------------------------------------------------------------------------
def _pick_seq_tile(seq_len: int, row_bytes: int, target_block_bytes: int) -> int:
    """Largest multiple-of-8 sequence tile with x block <= target_block_bytes."""
    ts = (target_block_bytes // max(row_bytes, 1)) // 8 * 8
    ts = max(8, ts)
    return seq_len if ts >= seq_len else ts


def positional_encoding(x, pe, *, dropout_p: float = 0.1, training: bool = False,
                        key=None, target_block_bytes: int = 1 << 20):
    """x: [S, B, D], pe: [max_len, D] (max_len >= S)."""
    S, B, D = x.shape
    assert pe.shape[0] >= S and pe.shape[1] == D

    if training and dropout_p >= 1.0:          # guard 1/(1-p) division by zero
        return jnp.zeros_like(x)

    BD = B * D
    x2 = x.reshape(S, BD)                      # contiguous -> layout-free reshape
    itemsize = x2.dtype.itemsize
    ts = _pick_seq_tile(S, BD * itemsize, target_block_bytes)
    grid = (pl.cdiv(S, ts),)

    x_spec = pl.BlockSpec((ts, BD), lambda i: (i, 0))
    pe_spec = pl.BlockSpec((ts, D), lambda i: (i, 0))
    out_spec = pl.BlockSpec((ts, BD), lambda i: (i, 0))
    out_shape = jax.ShapeDtypeStruct((S, BD), x.dtype)
    compiler_params = pltpu.CompilerParams(
        dimension_semantics=("parallel",),
        vmem_limit_bytes=32 * 1024 * 1024,
    )

    if (not training) or dropout_p == 0.0:
        cost = pl.CostEstimate(
            flops=S * BD, transcendentals=0,
            bytes_accessed=2 * S * BD * itemsize + S * D * pe.dtype.itemsize)
        out2 = pl.pallas_call(
            functools.partial(_pe_add_kernel, batch=B),
            out_shape=out_shape,
            grid_spec=pltpu.PrefetchScalarGridSpec(
                num_scalar_prefetch=0, grid=grid,
                in_specs=[x_spec, pe_spec], out_specs=out_spec),
            compiler_params=compiler_params,
            cost_estimate=cost,
        )(x2, pe)
        return out2.reshape(S, B, D)

    if key is None:
        key = jax.random.PRNGKey(0)
    bits = jax.random.bits(key, (S, BD), dtype=jnp.uint32)
    bits_spec = pl.BlockSpec((ts, BD), lambda i: (i, 0))
    cost = pl.CostEstimate(
        flops=3 * S * BD, transcendentals=0,
        bytes_accessed=2 * S * BD * itemsize + S * BD * 4 + S * D * pe.dtype.itemsize)
    out2 = pl.pallas_call(
        functools.partial(_pe_add_dropout_kernel, batch=B, p=float(dropout_p)),
        out_shape=out_shape,
        grid_spec=pltpu.PrefetchScalarGridSpec(
            num_scalar_prefetch=0, grid=grid,
            in_specs=[x_spec, bits_spec, pe_spec], out_specs=out_spec),
        compiler_params=compiler_params,
        cost_estimate=cost,
    )(x2, bits, pe)
    return out2.reshape(S, B, D)


# ----------------------------------------------------------------------------
# Demo / correctness smoke test
# ----------------------------------------------------------------------------
if __name__ == "__main__":
    S, B, D = 8, 2, 32
    max_len = 64

    root = jax.random.PRNGKey(0)
    kx, kd = jax.random.split(root)
    x = jax.random.normal(kx, (S, B, D), dtype=jnp.float32)
    pe = make_positional_encoding_table(d_model=D, max_len=max_len)

    # Eval mode (dropout = identity, matches torch .eval()).
    out = jax.block_until_ready(positional_encoding(x, pe, dropout_p=0.1, training=False))
    ref = x + pe[:S, None, :]
    assert out.shape == (S, B, D)
    assert jnp.allclose(out, ref, atol=1e-6), "eval-mode mismatch vs. reference"

    # Eval mode with a forced multi-step grid (exercise sequence tiling).
    S2, B2, D2 = 64, 2, 128
    x_big = jax.random.normal(kx, (S2, B2, D2), dtype=jnp.float32)
    pe_big = make_positional_encoding_table(d_model=D2, max_len=128)
    out_big = jax.block_until_ready(
        positional_encoding(x_big, pe_big, training=False, target_block_bytes=16 * 1024))
    ref_big = x_big + pe_big[:S2, None, :]
    assert jnp.allclose(out_big, ref_big, atol=1e-6), "tiled eval-mode mismatch"

    # Training mode (inverted dropout): every element is 0 or (x+pe)/(1-p).
    p = 0.25
    out_tr = jax.block_until_ready(
        positional_encoding(x, pe, dropout_p=p, training=True, key=kd))
    assert out_tr.shape == (S, B, D)
    scale = 1.0 / (1.0 - p)
    ok = jnp.isclose(out_tr, 0.0, atol=1e-6) | jnp.isclose(
        out_tr, ref * scale, atol=1e-5, rtol=1e-5)
    assert bool(jnp.all(ok)), "training-mode values are not {0, (x+pe)/(1-p)}"

    print("KERNEL_OK")
</pallas_src>

<mosaic_0001>
module attributes {stable_mosaic.version = 11 : i64} {
  func.func @_pe_add_kernel(%arg0: i32, %arg1: memref<8x64xf32, #tpu.memory_space<vmem>>, %arg2: memref<8x32xf32, #tpu.memory_space<vmem>>, %arg3: memref<8x64xf32, #tpu.memory_space<vmem>>) attributes {dimension_semantics = [#tpu.dimension_semantics<parallel>], iteration_bounds = array<i64: 1>, scalar_prefetch = 0 : i64, scratch_operands = 0 : i64, tpu.core_type = #tpu.core_type<tc>, window_params = [{transform_indices = @transform_0, window_bounds = array<i64: 8, 64>}, {transform_indices = @transform_1, window_bounds = array<i64: 8, 32>}, {transform_indices = @transform_2, window_bounds = array<i64: 8, 64>}]} {
    %c0 = arith.constant 0 : index
    %c0_0 = arith.constant 0 : index
    %0 = vector.load %arg2[%c0, %c0_0] : memref<8x32xf32, #tpu.memory_space<vmem>>, vector<8x32xf32>
    %1 = tpu.concatenate %0, %0 in 1 : vector<8x32xf32>, vector<8x32xf32> -> vector<8x64xf32>
    %c0_1 = arith.constant 0 : index
    %c0_2 = arith.constant 0 : index
    %2 = vector.load %arg1[%c0_1, %c0_2] : memref<8x64xf32, #tpu.memory_space<vmem>>, vector<8x64xf32>
    %3 = arith.addf %2, %1 : vector<8x64xf32>
    %c0_3 = arith.constant 0 : index
    %c0_4 = arith.constant 0 : index
    %4 = vector.load %arg3[%c0_3, %c0_4] : memref<8x64xf32, #tpu.memory_space<vmem>>, vector<8x64xf32>
    tpu.vector_store %arg3[%c0_3, %c0_4], %3 {strides = array<i32>} : memref<8x64xf32, #tpu.memory_space<vmem>>, vector<8x64xf32>,
    return
  }
  func.func @transform_0(%arg0: i32) -> (i32, i32) {
    %c0_i32 = arith.constant 0 : i32
    %c0_i32_0 = arith.constant 0 : i32
    return %arg0, %c0_i32 : i32, i32
  }
  func.func @transform_1(%arg0: i32) -> (i32, i32) {
    %c0_i32 = arith.constant 0 : i32
    %c0_i32_0 = arith.constant 0 : i32
    return %arg0, %c0_i32 : i32, i32
  }
  func.func @transform_2(%arg0: i32) -> (i32, i32) {
    %c0_i32 = arith.constant 0 : i32
    %c0_i32_0 = arith.constant 0 : i32
    return %arg0, %c0_i32 : i32, i32
  }
}

</mosaic_0001>

<llo_original>
// kernel: tpu_custom_call.1
$region0: #{tpu_custom_call.1}
  #allocation0 [shape = 'u32[]', space=smem, size = 0x4, offset = 0x4, fixed_abs, tag = 'smem constant byte address 0x4 - core index']
  #allocation1 [shape = 'u32[144,128]{1,0:T(1,128)}', space=vmem, size = 0x12000, scoped, tag = 'internal scratch']
  %s0 = inlined_call_operand.vmem [shape: f32[8,64], index: 0, kind: input, shape index: {}]
  %s1 = inlined_call_operand.vmem [shape: f32[64,32], index: 1, kind: input, shape index: {}]
  %s2 = inlined_call_operand.hbm [shape: f32[8,64], index: 2, kind: output, shape index: {}]
  %s3 = sld [smem:[#allocation0]]
  $region18: #{tpu_custom_call.1} parent=0
    _
  %s5 = ssub.s32 1, %s3
  %s6 = scalar_select 0, %s5, %s3
  $region1: #{tpu_custom_call.1} parent=0
    #allocation2 [shape = 'u8[4096]{0}', space=vmem, size = 0x1000, scoped, tag = 'output window, operand 0, single buffered']
    #allocation3 [shape = 's32[1]{0}', space=sflag, size = 0x4, scoped, tag = 'scoped memory for tpu_custom_call.1']
    %7 = vsyncpa [#allocation3], 0
    // Predicated region
    $region2: #{tpu_custom_call.1} parent=1 // pred_check
      _
    $region3: #{tpu_custom_call.1} parent=1 // pred_check_branch
      %9 = sbr.rel (0) target = $region5
    $region4: #{tpu_custom_call.1} parent=1 // pred_region
      _
    $region5: #{tpu_custom_call.1} parent=1 // pred_fallthru
      _
    // Predicated region
    $region6: #{tpu_custom_call.1} parent=1 // pred_check
      _
    $region7: #{tpu_custom_call.1} parent=1 // pred_check_branch
      %11 = sbr.rel (0) target = $region9
    $region8: #{tpu_custom_call.1} parent=1 // pred_region
      _
    $region9: #{tpu_custom_call.1} parent=1 // pred_fallthru
      _
    %v12 = vld [vmem:[%s1] sm:$0xff]
    %14 = vrot.lane.b32.xlu0 %v12, 32
    %v15 = vpop.permute.xlu0 %14
    %vm17 = vcmask 261120
    %v18 = vsel %vm17, %v12, %v15
    %v19 = vld [vmem:[%s0] sm:$0xff]
    %v20 = vadd.f32 %v19, %v18
    %vm21 = vcmask 523264
    %22 = vst.msk [vmem:[#allocation2] sm:$0xff] %vm21, %v20
    // Predicated region
    $region10: #{tpu_custom_call.1} parent=1 // pred_check
      _
    $region11: #{tpu_custom_call.1} parent=1 // pred_check_branch
      %24 = sbr.rel (0) target = $region13
    $region12: #{tpu_custom_call.1} parent=1 // pred_region
      %s26 = ssub.s32 128, 128
      %27 = vsyncadd [#allocation3], %s26
      %s29 = sshll.u32 [#allocation2], 4
      %s30 = int_to_ptr.vmem [resolvable:$true] %s29
      %32 = dma.vmem_to_hbm [thread:$0]  %s30, 128, %s2, [#allocation3]
    $region13: #{tpu_custom_call.1} parent=1 // pred_fallthru
      _
    // Predicated region
    $region14: #{tpu_custom_call.1} parent=1 // pred_check
      _
    $region15: #{tpu_custom_call.1} parent=1 // pred_check_branch
      %34 = sbr.rel (0) target = $region17
    $region16: #{tpu_custom_call.1} parent=1 // pred_region
      %35 = dma.done [#allocation3], 128
    $region17: #{tpu_custom_call.1} parent=1 // pred_fallthru
      _
    %36 = vsyncpa [#allocation3], 1

</llo_original>
